<compile_context>
chip_gen: v6e
topology: v6e:2x2x1
jax: 0.10.0
libtpu: 0.0.40
codegen_flags: <defaults>
</compile_context>

<pallas_src>
import math
import jax
import jax.numpy as jnp
from jax.experimental import pallas as pl
from jax.experimental.pallas import tpu as pltpu


# ----------------------------------------------------------------------------
# tile chooser: largest multiple of `align`, <= target, that divides n;
# falls back to the full dimension (valid block: full dims are always allowed)
# ----------------------------------------------------------------------------
def _pick_tile(n, target, align):
    t = min(target, n)
    t = (t // align) * align
    while t >= align:
        if n % t == 0:
            return t
        t -= align
    return n


# ----------------------------------------------------------------------------
# Kernel 1 (prep, row-tiled): one pass over A produces
#   dinv  = rsqrt(rowsum(A) + 1)          (self-loop folded analytically)
#   score = tanh((X . p) * rsqrt(|p|^2))  (VPU multiply + lane reduce, no MXU)
# ----------------------------------------------------------------------------
def _prep_kernel(a_ref, x_ref, p_ref, dinv_ref, score_ref):
    a = a_ref[...].astype(jnp.float32)                     # (tm, N) int32 -> f32
    deg = jnp.sum(a, axis=1, keepdims=True) + 1.0          # + self-loop
    dinv_ref[...] = jax.lax.rsqrt(deg)                     # deg >= 1, no guard

    p = p_ref[...]                                         # (1, C)
    inv_pnorm = jax.lax.rsqrt(jnp.sum(p * p))
    s = jnp.sum(x_ref[...] * p, axis=1, keepdims=True) * inv_pnorm
    score_ref[...] = jnp.tanh(s)                           # (tm, 1)


def prep_pass(adjacency, x, p_vec, row_tile=512):
    N, C = x.shape
    tm = _pick_tile(N, row_tile, 8)
    grid = (N // tm,)
    return pl.pallas_call(
        _prep_kernel,
        out_shape=(jax.ShapeDtypeStruct((N, 1), jnp.float32),
                   jax.ShapeDtypeStruct((N, 1), jnp.float32)),
        grid_spec=pltpu.PrefetchScalarGridSpec(
            num_scalar_prefetch=0, grid=grid,
            in_specs=[pl.BlockSpec((tm, N), lambda i: (i, 0)),
                      pl.BlockSpec((tm, C), lambda i: (i, 0)),
                      pl.BlockSpec((1, C), lambda i: (0, 0))],
            out_specs=[pl.BlockSpec((tm, 1), lambda i: (i, 0)),
                       pl.BlockSpec((tm, 1), lambda i: (i, 0))]),
        compiler_params=pltpu.CompilerParams(
            dimension_semantics=("parallel",)),
    )(adjacency, x, p_vec.reshape(1, C))


# ----------------------------------------------------------------------------
# Kernel 2: single-step GRU (PyTorch gate ordering [r, z, n])
#   h' = (1 - z) * n + z * h
# Weights arrive pre-split per gate and pre-transposed: (3, C, C) / (3, 1, C).
# ----------------------------------------------------------------------------
def _gru_kernel(x_ref, h_ref, wih_ref, whh_ref, bih_ref, bhh_ref, out_ref):
    x = x_ref[...]                                         # (B, C), B == C
    h = h_ref[...]                                         # (B, C)

    def gates(g):
        gi = jnp.dot(x, wih_ref[g], preferred_element_type=jnp.float32) + bih_ref[g]
        gh = jnp.dot(h, whh_ref[g], preferred_element_type=jnp.float32) + bhh_ref[g]
        return gi, gh

    i_r, h_r = gates(0)
    i_z, h_z = gates(1)
    i_n, h_n = gates(2)
    r = jax.nn.sigmoid(i_r + h_r)
    z = jax.nn.sigmoid(i_z + h_z)
    n = jnp.tanh(i_n + r * h_n)
    out_ref[...] = (1.0 - z) * n + z * h


def gru_step(x, h, wih_t, whh_t, bih, bhh):
    B, C = h.shape
    return pl.pallas_call(
        _gru_kernel,
        out_shape=jax.ShapeDtypeStruct((B, C), jnp.float32),
        in_specs=[pl.BlockSpec(memory_space=pltpu.MemorySpace.VMEM)] * 6,
        out_specs=pl.BlockSpec(memory_space=pltpu.MemorySpace.VMEM),
    )(x, h, wih_t, whh_t, bih, bhh)


# ----------------------------------------------------------------------------
# Kernel 3: GCNConv, tiled (grid = rows x reduction), normalization folded:
#   z      = dinv[:,None] * (X @ Wp)          (recomputed per k-tile, tiny)
#   acc_i  = z_i + sum_k A[i,k] @ z_k          (self-loop = + z_i at k == 0)
#   out_i  = dinv_i * acc_i
# Wp is the evolved weight zero-padded to a 128-lane-dense channel slab.
# ----------------------------------------------------------------------------
def _gcn_kernel(a_ref, xk_ref, xi_ref, dk_ref, di_ref, w_ref, out_ref, acc_ref):
    k = pl.program_id(1)
    w = w_ref[...]                                         # (C, Cp)

    @pl.when(k == 0)
    def _():
        # self-loop contribution for the output rows: I @ z = dinv_i * (X_i @ Wp)
        acc_ref[...] = di_ref[...] * jnp.dot(
            xi_ref[...], w, preferred_element_type=jnp.float32)

    a = a_ref[...].astype(jnp.float32)                     # (tm, tk) int -> f32
    zk = dk_ref[...] * jnp.dot(xk_ref[...], w,
                               preferred_element_type=jnp.float32)  # (tk, Cp)
    acc_ref[...] += jnp.dot(a, zk, preferred_element_type=jnp.float32)

    @pl.when(k == pl.num_programs(1) - 1)
    def _():
        out_ref[...] = (di_ref[...] * acc_ref[...]).astype(out_ref.dtype)


def gcn_conv(adjacency, x, w_pad, dinv, row_tile=512, k_tile=1024):
    N, C = x.shape
    Cp = w_pad.shape[1]
    tm = _pick_tile(N, row_tile, 8)
    tk = _pick_tile(N, k_tile, 128)
    grid = (N // tm, N // tk)
    return pl.pallas_call(
        _gcn_kernel,
        out_shape=jax.ShapeDtypeStruct((N, Cp), jnp.float32),
        grid_spec=pltpu.PrefetchScalarGridSpec(
            num_scalar_prefetch=0, grid=grid,
            in_specs=[
                pl.BlockSpec((tm, tk), lambda i, k: (i, k)),  # A tile
                pl.BlockSpec((tk, C), lambda i, k: (k, 0)),   # X rows (column side)
                pl.BlockSpec((tm, C), lambda i, k: (i, 0)),   # X rows (self-loop side)
                pl.BlockSpec((tk, 1), lambda i, k: (k, 0)),   # dinv (column side)
                pl.BlockSpec((tm, 1), lambda i, k: (i, 0)),   # dinv (row side)
                pl.BlockSpec((C, Cp), lambda i, k: (0, 0)),   # evolved weight (padded)
            ],
            out_specs=pl.BlockSpec((tm, Cp), lambda i, k: (i, 0)),
            scratch_shapes=[pltpu.VMEM((tm, Cp), jnp.float32)]),
        compiler_params=pltpu.CompilerParams(
            dimension_semantics=("parallel", "arbitrary")),
    )(adjacency, x, x, dinv, dinv, w_pad)


# ----------------------------------------------------------------------------
# one-time parameter preprocessing (gate split + transpose, hoisted out of the
# per-step path so no per-call XLA transposes / lane-axis slicing in-kernel)
# ----------------------------------------------------------------------------
def preprocess_params(params):
    C = params["gcn_weight"].shape[0]
    p = dict(params)
    p["gru_wih_t"] = params["gru_w_ih"].reshape(3, C, C).transpose(0, 2, 1)
    p["gru_whh_t"] = params["gru_w_hh"].reshape(3, C, C).transpose(0, 2, 1)
    p["gru_bih"] = params["gru_b_ih"].reshape(3, 1, C)
    p["gru_bhh"] = params["gru_b_hh"].reshape(3, 1, C)
    return p


# ----------------------------------------------------------------------------
# EvolveGCNH forward
# ----------------------------------------------------------------------------
def evolve_gcn_h_forward(X, adjacency, params):
    N, C = X.shape
    k = C  # ceil((C/N) * N) == in_channels exactly (review: avoid float rounding)

    # --- prep: degrees (with self-loop) + pooling scores, one pass over A ----
    dinv, score = prep_pass(adjacency, X, params["pool_p"])

    # --- TopKPooling selection ----------------------------------------------
    # TODO(synk): data-dependent top-k sort + row gather stays in XLA
    # (lax.top_k / fancy indexing); only k = C rows are touched, negligible.
    _, perm = jax.lax.top_k(score[:, 0], k)                 # descending, like torch.topk
    X_tilde = X[perm] * score[perm]                         # (C, C)

    # --- GRU: evolve the GCN weight -----------------------------------------
    W_new = gru_step(X_tilde, params["gcn_weight"],
                     params["gru_wih_t"], params["gru_whh_t"],
                     params["gru_bih"], params["gru_bhh"])  # (C, C)

    # --- GCNConv --------------------------------------------------------------
    Cp = max(128, ((C + 127) // 128) * 128)                 # lane-dense channel slab
    W_pad = jnp.pad(W_new, ((0, 0), (0, Cp - C)))
    out_pad = gcn_conv(adjacency, X, W_pad, dinv)           # (N, Cp)
    return out_pad[:, :C]                                   # (N, C)


# ----------------------------------------------------------------------------
# Pure-JAX reference for correctness check
# ----------------------------------------------------------------------------
def reference_forward(X, adjacency, params):
    N, C = X.shape
    p = params["pool_p"]
    score = jnp.tanh(X @ p / jnp.linalg.norm(p))
    _, perm = jax.lax.top_k(score, C)
    x_t = X[perm] * score[perm][:, None]
    h = params["gcn_weight"]
    gi = x_t @ params["gru_w_ih"].T + params["gru_b_ih"]
    gh = h @ params["gru_w_hh"].T + params["gru_b_hh"]
    i_r, i_z, i_n = gi[:, :C], gi[:, C:2 * C], gi[:, 2 * C:]
    h_r, h_z, h_n = gh[:, :C], gh[:, C:2 * C], gh[:, 2 * C:]
    r = jax.nn.sigmoid(i_r + h_r)
    z = jax.nn.sigmoid(i_z + h_z)
    n = jnp.tanh(i_n + r * h_n)
    w_new = (1.0 - z) * n + z * h
    a_hat = adjacency.astype(jnp.float32) + jnp.eye(N)
    deg = a_hat.sum(0)
    dinv = jnp.where(deg > 0, deg ** -0.5, 0.0)
    norm_adj = dinv[:, None] * a_hat * dinv[None, :]
    return norm_adj @ (X @ w_new)


if __name__ == "__main__":
    num_of_nodes = 16
    in_channels = 8
    out_channels = 4      # self.linear(out_channels) exists but is unused in forward

    key = jax.random.PRNGKey(0)
    k_x, k_a, k_p, k_w, k_ih, k_hh, k_bi, k_bh = jax.random.split(key, 8)

    # Node features
    X = jax.random.normal(k_x, (num_of_nodes, in_channels), dtype=jnp.float32)

    # Binary symmetric adjacency (LongTensor in the PyTorch spec), no self-loops
    upper = (jax.random.uniform(k_a, (num_of_nodes, num_of_nodes)) < 0.3).astype(jnp.float32)
    upper = jnp.triu(upper, k=1)
    adjacency = (upper + upper.T).astype(jnp.int32)

    # Deterministic parameter init (shapes match the PyTorch module __init__)
    s = 1.0 / math.sqrt(in_channels)
    params = {
        "pool_p":     jax.random.normal(k_p, (in_channels,), dtype=jnp.float32),
        "gcn_weight": jax.random.uniform(k_w, (in_channels, in_channels),
                                         minval=-s, maxval=s, dtype=jnp.float32),
        "gru_w_ih":   jax.random.uniform(k_ih, (3 * in_channels, in_channels),
                                         minval=-s, maxval=s, dtype=jnp.float32),
        "gru_w_hh":   jax.random.uniform(k_hh, (3 * in_channels, in_channels),
                                         minval=-s, maxval=s, dtype=jnp.float32),
        "gru_b_ih":   jax.random.uniform(k_bi, (3 * in_channels,),
                                         minval=-s, maxval=s, dtype=jnp.float32),
        "gru_b_hh":   jax.random.uniform(k_bh, (3 * in_channels,),
                                         minval=-s, maxval=s, dtype=jnp.float32),
    }
    prepped = preprocess_params(params)

    out = evolve_gcn_h_forward(X, adjacency, prepped)
    out = jax.block_until_ready(out)

    ref = reference_forward(X, adjacency, params)
    assert out.shape == (num_of_nodes, in_channels)
    assert jnp.allclose(out, ref, atol=1e-4, rtol=1e-4), "mismatch vs reference"

    print("KERNEL_OK")
</pallas_src>

<mosaic_0001>
module attributes {stable_mosaic.version = 11 : i64} {
  func.func @_prep_kernel(%arg0: i32, %arg1: memref<16x16xi32, #tpu.memory_space<vmem>>, %arg2: memref<16x8xf32, #tpu.memory_space<vmem>>, %arg3: memref<1x8xf32, #tpu.memory_space<vmem>>, %arg4: memref<16x1xf32, #tpu.memory_space<vmem>>, %arg5: memref<16x1xf32, #tpu.memory_space<vmem>>) attributes {dimension_semantics = [#tpu.dimension_semantics<parallel>], iteration_bounds = array<i64: 1>, scalar_prefetch = 0 : i64, scratch_operands = 0 : i64, tpu.core_type = #tpu.core_type<tc>, window_params = [{transform_indices = @transform_0, window_bounds = array<i64: 16, 16>}, {transform_indices = @transform_1, window_bounds = array<i64: 16, 8>}, {pipeline_mode = #tpu.pipeline_mode<synchronous>, transform_indices = @transform_2, window_bounds = array<i64: 1, 8>}, {transform_indices = @transform_3, window_bounds = array<i64: 16, 1>}, {transform_indices = @transform_4, window_bounds = array<i64: 16, 1>}]} {
    %c0 = arith.constant 0 : index
    %c0_0 = arith.constant 0 : index
    %0 = vector.load %arg1[%c0, %c0_0] : memref<16x16xi32, #tpu.memory_space<vmem>>, vector<16x16xi32>
    %1 = arith.sitofp %0 : vector<16x16xi32> to vector<16x16xf32>
    %cst = arith.constant dense<0.000000e+00> : vector<16xf32>
    %2 = vector.multi_reduction <add>, %1, %cst [1] : vector<16x16xf32> to vector<16xf32>
    %3 = vector.shape_cast %2 : vector<16xf32> to vector<16x1xf32>
    %cst_1 = arith.constant 1.000000e+00 : f32
    %4 = vector.broadcast %cst_1 : f32 to vector<16x1xf32>
    %5 = arith.addf %3, %4 : vector<16x1xf32>
    %6 = math.rsqrt %5 : vector<16x1xf32>
    %c0_2 = arith.constant 0 : index
    %c0_3 = arith.constant 0 : index
    %7 = vector.load %arg4[%c0_2, %c0_3] : memref<16x1xf32, #tpu.memory_space<vmem>>, vector<16x1xf32>
    tpu.vector_store %arg4[%c0_2, %c0_3], %6 {strides = array<i32>} : memref<16x1xf32, #tpu.memory_space<vmem>>, vector<16x1xf32>,
    %c0_4 = arith.constant 0 : index
    %c0_5 = arith.constant 0 : index
    %8 = vector.load %arg3[%c0_4, %c0_5] : memref<1x8xf32, #tpu.memory_space<vmem>>, vector<1x8xf32>
    %9 = arith.mulf %8, %8 : vector<1x8xf32>
    %10 = vector.shape_cast %9 : vector<1x8xf32> to vector<1x1x8xf32>
    %cst_6 = arith.constant dense<0.000000e+00> : vector<1xf32>
    %11 = vector.multi_reduction <add>, %10, %cst_6 [1, 2] : vector<1x1x8xf32> to vector<1xf32>
    %12 = vector.shape_cast %11 : vector<1xf32> to vector<1x1x1xf32>
    %13 = vector.extract %12[0, 0, 0] : f32 from vector<1x1x1xf32>
    %14 = math.rsqrt %13 : f32
    %c0_7 = arith.constant 0 : index
    %c0_8 = arith.constant 0 : index
    %15 = vector.load %arg2[%c0_7, %c0_8] : memref<16x8xf32, #tpu.memory_space<vmem>>, vector<16x8xf32>
    %16 = vector.broadcast %8 : vector<1x8xf32> to vector<16x8xf32>
    %17 = arith.mulf %15, %16 : vector<16x8xf32>
    %cst_9 = arith.constant dense<0.000000e+00> : vector<16xf32>
    %18 = vector.multi_reduction <add>, %17, %cst_9 [1] : vector<16x8xf32> to vector<16xf32>
    %19 = vector.shape_cast %18 : vector<16xf32> to vector<16x1xf32>
    %20 = vector.broadcast %14 : f32 to vector<16x1xf32>
    %21 = arith.mulf %19, %20 : vector<16x1xf32>
    %22 = math.tanh %21 : vector<16x1xf32>
    %c0_10 = arith.constant 0 : index
    %c0_11 = arith.constant 0 : index
    %23 = vector.load %arg5[%c0_10, %c0_11] : memref<16x1xf32, #tpu.memory_space<vmem>>, vector<16x1xf32>
    tpu.vector_store %arg5[%c0_10, %c0_11], %22 {strides = array<i32>} : memref<16x1xf32, #tpu.memory_space<vmem>>, vector<16x1xf32>,
    return
  }
  func.func @transform_0(%arg0: i32) -> (i32, i32) {
    %c0_i32 = arith.constant 0 : i32
    %c0_i32_0 = arith.constant 0 : i32
    return %arg0, %c0_i32 : i32, i32
  }
  func.func @transform_1(%arg0: i32) -> (i32, i32) {
    %c0_i32 = arith.constant 0 : i32
    %c0_i32_0 = arith.constant 0 : i32
    return %arg0, %c0_i32 : i32, i32
  }
  func.func @transform_2(%arg0: i32) -> (i32, i32) {
    %c0_i32 = arith.constant 0 : i32
    %c0_i32_0 = arith.constant 0 : i32
    %c0_i32_1 = arith.constant 0 : i32
    return %c0_i32, %c0_i32_0 : i32, i32
  }
  func.func @transform_3(%arg0: i32) -> (i32, i32) {
    %c0_i32 = arith.constant 0 : i32
    %c0_i32_0 = arith.constant 0 : i32
    return %arg0, %c0_i32 : i32, i32
  }
  func.func @transform_4(%arg0: i32) -> (i32, i32) {
    %c0_i32 = arith.constant 0 : i32
    %c0_i32_0 = arith.constant 0 : i32
    return %arg0, %c0_i32 : i32, i32
  }
}

</mosaic_0001>

<llo_original>
// kernel: tpu_custom_call.1
$region0: #{tpu_custom_call.1}
  #allocation0 [shape = 'u32[]', space=smem, size = 0x4, offset = 0x4, fixed_abs, tag = 'smem constant byte address 0x4 - core index']
  #allocation1 [shape = 'u32[144,128]{1,0:T(1,128)}', space=vmem, size = 0x12000, scoped, tag = 'internal scratch']
  %s0 = inlined_call_operand.vmem [shape: s32[16,16], index: 0, kind: input, shape index: {}]
  %s1 = inlined_call_operand.vmem [shape: f32[16,8], index: 1, kind: input, shape index: {}]
  %s2 = inlined_call_operand.vmem [shape: f32[1,8], index: 2, kind: input, shape index: {}]
  %s3 = inlined_call_operand.vmem [shape: f32[16,1], index: 3, kind: output, shape index: {0}]
  %s4 = inlined_call_operand.vmem [shape: f32[16,1], index: 4, kind: output, shape index: {1}]
  %5 = xla_tuple %s3, %s4
  %s6 = sld [smem:[#allocation0]]
  $region30: #{tpu_custom_call.1} parent=0
    _
  %s8 = ssub.s32 1, %s6
  %s9 = scalar_select 0, %s8, %s6
  // Predicated region
  $region2: #{tpu_custom_call.1} parent=0 // pred_check
    _
  $region3: #{tpu_custom_call.1} parent=0 // pred_check_branch
    %11 = sbr.rel (0) target = $region5
  $region4: #{tpu_custom_call.1} parent=0 // pred_region
    _
  $region5: #{tpu_custom_call.1} parent=0 // pred_fallthru
    _
  // Predicated region
  $region6: #{tpu_custom_call.1} parent=0 // pred_check
    _
  $region7: #{tpu_custom_call.1} parent=0 // pred_check_branch
    %13 = sbr.rel (0) target = $region9
  $region8: #{tpu_custom_call.1} parent=0 // pred_region
    _
  $region9: #{tpu_custom_call.1} parent=0 // pred_fallthru
    _
  // Predicated region
  $region10: #{tpu_custom_call.1} parent=0 // pred_check
    _
  $region11: #{tpu_custom_call.1} parent=0 // pred_check_branch
    %15 = sbr.rel (0) target = $region13
  $region12: #{tpu_custom_call.1} parent=0 // pred_region
    _
  $region13: #{tpu_custom_call.1} parent=0 // pred_fallthru
    _
  %v16 = vld [vmem:[%s0] sm:$0xff]
  %v17 = vld [vmem:[%s0 + $0x8] sm:$0xff]
  %v18 = vcvt.s32.f32 %v16
  %v19 = vcvt.s32.f32 %v17
  %vm20 = vcmask 130048
  %v21 = vsel %vm20, %v18, 0.0
  %22 = vadd.xlane.f32.xlu0 %v21
  %v23 = vpop.xlane.xlu0 %22
  %v24 = vsel %vm20, %v19, 0.0
  %25 = vadd.xlane.f32.xlu0 %v24
  %v26 = vpop.xlane.xlu0 %25
  %v27 = vadd.f32 %v23, 1.0
  %v28 = vadd.f32 %v26, 1.0
  %v29 = vrsqrt.pop %v27
  %v30 = vrsqrt.pop %v28
  %vm31 = vcmask 7168
  %32 = vst.msk [vmem:[%s3] sm:$0xff] %vm31, %v29
  %33 = vst.msk [vmem:[%s3 + $0x8] sm:$0xff] %vm31, %v30
  %v34 = vld [vmem:[%s2] sm:$0x1]
  %v35 = vmul.f32 %v34, %v34
  %vm36 = vcmask 57344
  %v37 = vsel %vm36, %v35, 0.0
  %38 = vadd.xlane.f32.xlu0 %v37
  %v39 = vpop.xlane.xlu0 %38
  %v40 = vrot.slane %v39, 4
  %v41 = vadd.f32 %v39, %v40
  %v42 = vrot.slane %v41, 2
  %v43 = vadd.f32 %v41, %v42
  %v44 = vrot.slane %v43, 1
  %v45 = vadd.f32 %v43, %v44
  %s46 = vtos %v45
  %v47 = vstv %s46
  %v48 = vrsqrt.pop %v47
  %s49 = vtos %v48
  %v50 = vld [vmem:[%s1] sm:$0xff]
  %v51 = vld [vmem:[%s1 + $0x8] sm:$0xff]
  %v53 = vlaneseq
  %v54 = vshrl.u32 %v53, 7
  %v55 = vsub.s32 0, %v54
  %v56 = vrot.slane %v34, %v55
  %v58 = vmul.f32 %v50, %v56
  %v59 = vmul.f32 %v51, %v56
  %vm60 = vcmask 64512
  %v61 = vsel %vm60, %v58, 0.0
  %62 = vadd.xlane.f32.xlu0 %v61
  %v63 = vpop.xlane.xlu0 %62
  %v64 = vsel %vm60, %v59, 0.0
  %65 = vadd.xlane.f32.xlu0 %v64
  %v66 = vpop.xlane.xlu0 %65
  %v67 = vstv %s49
  %v68 = vmul.f32 %v63, %v67
  %v69 = vmul.f32 %v66, %v67
  %v70 = vtanh.pop %v68
  %v71 = vtanh.pop %v69
  %72 = vst.msk [vmem:[%s4] sm:$0xff] %vm31, %v70
  %73 = vst.msk [vmem:[%s4 + $0x8] sm:$0xff] %vm31, %v71
  // Predicated region
  $region14: #{tpu_custom_call.1} parent=0 // pred_check
    _
  $region15: #{tpu_custom_call.1} parent=0 // pred_check_branch
    %75 = sbr.rel (0) target = $region17
  $region16: #{tpu_custom_call.1} parent=0 // pred_region
    _
  $region17: #{tpu_custom_call.1} parent=0 // pred_fallthru
    _
  // Predicated region
  $region18: #{tpu_custom_call.1} parent=0 // pred_check
    _
  $region19: #{tpu_custom_call.1} parent=0 // pred_check_branch
    %77 = sbr.rel (0) target = $region21
  $region20: #{tpu_custom_call.1} parent=0 // pred_region
    _
  $region21: #{tpu_custom_call.1} parent=0 // pred_fallthru
    _
  // Predicated region
  $region22: #{tpu_custom_call.1} parent=0 // pred_check
    _
  $region23: #{tpu_custom_call.1} parent=0 // pred_check_branch
    %79 = sbr.rel (0) target = $region25
  $region24: #{tpu_custom_call.1} parent=0 // pred_region
    _
  $region25: #{tpu_custom_call.1} parent=0 // pred_fallthru
    _
  // Predicated region
  $region26: #{tpu_custom_call.1} parent=0 // pred_check
    _
  $region27: #{tpu_custom_call.1} parent=0 // pred_check_branch
    %81 = sbr.rel (0) target = $region29
  $region28: #{tpu_custom_call.1} parent=0 // pred_region
    _
  $region29: #{tpu_custom_call.1} parent=0 // pred_fallthru
    _

</llo_original>
